<compile_context>
chip_gen: v7x
topology: tpu7x:2x2x1
jax: 0.10.0
libtpu: 0.0.40
codegen_flags: <defaults>
</compile_context>

<pallas_src>
import functools

import jax
import jax.numpy as jnp
from jax.experimental import pallas as pl
from jax.experimental.pallas import tpu as pltpu

_LANE = 128
_SUBLANE = 8


def _round_up(x, m):
    return (x + m - 1) // m * m


# --------------------------------------------------------------------------
# Kernel: whole MLP for one batch tile; activation never leaves VMEM/vregs.
# refs = (w1, b1, ..., wL, bL, o_ref).  Weights are (in_p, out_p) bf16,
# biases are (1, out_p) f32 (cast to the epilogue dtype in-kernel, 1 row).
# --------------------------------------------------------------------------
def _fused_mlp_kernel(x_ref, *refs, num_layers, compute_dtype, epilogue_dtype):
    o_ref = refs[2 * num_layers]
    act = x_ref[...]                                     # (tb, in_p), f32 or bf16
    for l in range(num_layers):
        w_ref = refs[2 * l]
        b_ref = refs[2 * l + 1]
        y = jnp.dot(act.astype(compute_dtype), w_ref[...],
                    preferred_element_type=jnp.float32)  # MXU, f32 accumulate
        if l < num_layers - 1:
            # bf16 epilogue on v6e/v7x (bf16 VPU); f32 on v5e.  The cast to
            # compute_dtype is needed before the next matmul anyway.
            y = y.astype(epilogue_dtype) + b_ref[...].astype(epilogue_dtype)
            act = jnp.maximum(y, 0.0)
        else:
            act = y + b_ref[...]                         # final bias-add in f32
    o_ref[...] = act.astype(o_ref.dtype)                 # lane-dense store


# --------------------------------------------------------------------------
# Parameter init / prep (mirrors fashionFCNinit.__init__; done once, offline).
# --------------------------------------------------------------------------
def init_fashion_fcn_params(key, num_layers, layer_dim, dtype=jnp.float32):
    """kaiming_normal_(fan_in, relu) weights, zero biases; PyTorch (out, in)."""
    params = []
    for i in range(num_layers):
        key, sub = jax.random.split(key)
        fan_in, fan_out = layer_dim[i], layer_dim[i + 1]
        std = (2.0 / fan_in) ** 0.5
        w = std * jax.random.normal(sub, (fan_out, fan_in), dtype=dtype)
        b = jnp.zeros((fan_out,), dtype=dtype)
        params.append((w, b))
    return params


def prepare_params(params, compute_dtype=jnp.bfloat16):
    """Transpose to (in, out), zero-pad feature dims to multiples of 128,
    cast weights to the MXU input dtype; biases stay f32."""
    prepared = []
    for w, b in params:
        out_d, in_d = w.shape
        in_p, out_p = _round_up(in_d, _LANE), _round_up(out_d, _LANE)
        w_t = jnp.zeros((in_p, out_p), dtype=compute_dtype)
        w_t = w_t.at[:in_d, :out_d].set(w.T.astype(compute_dtype))
        b_p = jnp.zeros((1, out_p), dtype=jnp.float32)
        b_p = b_p.at[0, :out_d].set(b.astype(jnp.float32))
        prepared.append((w_t, b_p))
    return prepared


# --------------------------------------------------------------------------
# Batch-tile selection (step-overhead / padding / megacore aware).
# --------------------------------------------------------------------------
def _choose_block_b(B, target=512):
    B8 = _round_up(B, _SUBLANE)
    if B8 <= target:
        # Mid-sized batch: split into 2 tiles (16-aligned for bf16 inputs) so a
        # "parallel" grid of >=2 can shard across v7x's two TensorCores — but
        # only if the split does not add noticeable padding.
        if B8 >= 32:
            half = _round_up(B8 // 2, 16)
            if 2 * half - B8 <= 16:
                return half
        return B8                       # single full-extent tile, no padding
    # Large batch: 16-aligned tile near `target`, minimizing last-tile padding.
    best, best_waste = target, _round_up(B8, target) - B8
    for cand in range(384, 1025, 16):
        waste = _round_up(B8, cand) - B8
        if waste < best_waste or (waste == best_waste and cand > best):
            best, best_waste = cand, waste
    return best


# --------------------------------------------------------------------------
# Forward pass: one fused pallas_call.
# --------------------------------------------------------------------------
def fashion_fcn_forward(prepared_params, x, out_features,
                        *, compute_dtype=jnp.bfloat16, block_b=None):
    """x: (B, Din) f32 -> (B, out_features) f32."""
    B, Din = x.shape
    num_layers = len(prepared_params)
    in_p = prepared_params[0][0].shape[0]
    out_p = prepared_params[-1][0].shape[1]
    max_dim = max(in_p, out_p, *(w.shape[1] for w, _ in prepared_params))

    weight_bytes = sum(w.size * w.dtype.itemsize + b.size * b.dtype.itemsize
                       for w, b in prepared_params)

    # ---- per-chip facts ----------------------------------------------------
    kind = ""
    try:
        kind = jax.devices()[0].device_kind.lower()
    except Exception:
        pass
    # v5e has no bf16 VPU path -> keep the elementwise epilogue in f32 there.
    epilogue_dtype = jnp.float32 if "v5" in kind else compute_dtype
    try:
        vmem_cap = int(getattr(pltpu.get_tpu_info(), "vmem_capacity_bytes",
                               64 << 20))
    except Exception:
        vmem_cap = 64 << 20
    # Leave ~20% headroom for Mosaic internal scratch; never below 16 MiB.
    vmem_cap = max(16 << 20, int(vmem_cap * 0.8))

    # ---- resident-weight buffering ------------------------------------------
    # Constant index_maps already avoid re-DMA per step; single-buffering only
    # matters (VMEM footprint) once the weights are big, so gate on size.
    single_buffer_weights = weight_bytes >= (4 << 20) and hasattr(pl, "Buffered")
    weight_mult = 1 if single_buffer_weights else 2

    # ---- batch tile ----------------------------------------------------------
    if block_b is None:
        block_b = _choose_block_b(B)
    block_b = max(_SUBLANE,
                  _round_up(min(block_b, _round_up(B, _SUBLANE)), _SUBLANE))

    def _vmem_est(bb, x_itemsize):
        return (2 * bb * in_p * x_itemsize        # double-buffered input tiles
                + 2 * bb * out_p * 4              # double-buffered output tiles
                + 2 * bb * max_dim * 4            # in-kernel activation temps
                + weight_mult * weight_bytes
                + (2 << 20))                      # misc headroom

    while _vmem_est(block_b, 4) > vmem_cap and block_b > 16:
        block_b = max(16, _round_up(block_b // 2, 16))

    B_p = _round_up(B, block_b)
    needs_pad = (B_p != B) or (Din != in_p)
    if needs_pad:
        # Pad in bf16 (half the HBM bytes of an f32 pad); kernel casts anyway.
        x_in = jnp.zeros((B_p, in_p), dtype=compute_dtype)
        x_in = x_in.at[:B, :Din].set(x.astype(compute_dtype))
    else:
        x_in = x                                   # f32 straight through

    # ---- specs ---------------------------------------------------------------
    wb_kwargs = ({"pipeline_mode": pl.Buffered(1)}
                 if single_buffer_weights else {})
    flat_wb, wb_specs = [], []
    for w_t, b in prepared_params:
        flat_wb += [w_t, b]
        wb_specs.append(pl.BlockSpec(w_t.shape, lambda i: (0, 0), **wb_kwargs))
        wb_specs.append(pl.BlockSpec(b.shape, lambda i: (0, 0), **wb_kwargs))

    flops = 2 * B_p * sum(w.shape[0] * w.shape[1] for w, _ in prepared_params)
    bytes_accessed = (x_in.size * x_in.dtype.itemsize + weight_bytes
                      + B_p * out_p * 4)
    vmem_bytes = min(max(_vmem_est(block_b, x_in.dtype.itemsize), 16 << 20),
                     vmem_cap)

    kernel = functools.partial(_fused_mlp_kernel, num_layers=num_layers,
                               compute_dtype=compute_dtype,
                               epilogue_dtype=epilogue_dtype)

    out = pl.pallas_call(
        kernel,
        out_shape=jax.ShapeDtypeStruct((B_p, out_p), jnp.float32),
        grid_spec=pltpu.PrefetchScalarGridSpec(
            num_scalar_prefetch=0,
            grid=(B_p // block_b,),
            in_specs=[pl.BlockSpec((block_b, in_p), lambda i: (i, 0))] + wb_specs,
            out_specs=pl.BlockSpec((block_b, out_p), lambda i: (i, 0)),
        ),
        compiler_params=pltpu.CompilerParams(
            dimension_semantics=("parallel",),
            vmem_limit_bytes=vmem_bytes,
        ),
        cost_estimate=pl.CostEstimate(flops=flops, transcendentals=0,
                                      bytes_accessed=bytes_accessed),
    )(x_in, *flat_wb)

    return out[:B, :out_features]


if __name__ == "__main__":
    key = jax.random.PRNGKey(0)

    # Small MLP consistent with the module: 3 layers, dims [128, 256, 128, 32].
    num_layers = 3
    layer_dim = [128, 256, 128, 32]
    batch = 8

    kp, kx = jax.random.split(key)
    params = init_fashion_fcn_params(kp, num_layers, layer_dim)
    prepared = prepare_params(params, compute_dtype=jnp.bfloat16)
    x = jax.random.normal(kx, (batch, layer_dim[0]), dtype=jnp.float32)

    fwd = jax.jit(lambda p, xx: fashion_fcn_forward(p, xx,
                                                    out_features=layer_dim[-1]))
    y = fwd(prepared, x)
    jax.block_until_ready(y)
    assert y.shape == (batch, layer_dim[-1])

    # Reference with matching numerics (bf16 MXU inputs, f32 accumulation).
    ref = x
    for i, (w, b) in enumerate(params):
        ref = jnp.dot(ref.astype(jnp.bfloat16), w.T.astype(jnp.bfloat16),
                      preferred_element_type=jnp.float32) + b
        if i != num_layers - 1:
            ref = jnp.maximum(ref, 0.0)
    assert jnp.allclose(y, ref, atol=1e-2, rtol=1e-2), \
        float(jnp.max(jnp.abs(y - ref)))

    # Semantics sanity check against the pure-f32 module math.
    ref32 = x
    for i, (w, b) in enumerate(params):
        ref32 = ref32 @ w.T + b
        if i != num_layers - 1:
            ref32 = jnp.maximum(ref32, 0.0)
    assert jnp.allclose(y, ref32, atol=1e-1, rtol=1e-1)

    print("KERNEL_OK")
</pallas_src>

<mosaic_0001>
module attributes {stable_mosaic.version = 11 : i64} {
  func.func @_fused_mlp_kernel(%arg0: i32, %arg1: memref<8x128xf32, #tpu.memory_space<vmem>>, %arg2: memref<128x256xbf16, #tpu.memory_space<vmem>>, %arg3: memref<1x256xf32, #tpu.memory_space<vmem>>, %arg4: memref<256x128xbf16, #tpu.memory_space<vmem>>, %arg5: memref<1x128xf32, #tpu.memory_space<vmem>>, %arg6: memref<128x128xbf16, #tpu.memory_space<vmem>>, %arg7: memref<1x128xf32, #tpu.memory_space<vmem>>, %arg8: memref<8x128xf32, #tpu.memory_space<vmem>>) attributes {dimension_semantics = [#tpu.dimension_semantics<parallel>], iteration_bounds = array<i64: 1>, scalar_prefetch = 0 : i64, scratch_operands = 0 : i64, tpu.core_type = #tpu.core_type<tc>, window_params = [{transform_indices = @transform_0, window_bounds = array<i64: 8, 128>}, {pipeline_mode = #tpu.pipeline_mode<synchronous>, transform_indices = @transform_1, window_bounds = array<i64: 128, 256>}, {pipeline_mode = #tpu.pipeline_mode<synchronous>, transform_indices = @transform_2, window_bounds = array<i64: 1, 256>}, {pipeline_mode = #tpu.pipeline_mode<synchronous>, transform_indices = @transform_3, window_bounds = array<i64: 256, 128>}, {pipeline_mode = #tpu.pipeline_mode<synchronous>, transform_indices = @transform_4, window_bounds = array<i64: 1, 128>}, {pipeline_mode = #tpu.pipeline_mode<synchronous>, transform_indices = @transform_5, window_bounds = array<i64: 128, 128>}, {pipeline_mode = #tpu.pipeline_mode<synchronous>, transform_indices = @transform_6, window_bounds = array<i64: 1, 128>}, {transform_indices = @transform_7, window_bounds = array<i64: 8, 128>}]} {
    %c0 = arith.constant 0 : index
    %c0_0 = arith.constant 0 : index
    %0 = vector.load %arg1[%c0, %c0_0] : memref<8x128xf32, #tpu.memory_space<vmem>>, vector<8x128xf32>
    %1 = arith.truncf %0 : vector<8x128xf32> to vector<8x128xbf16>
    %c0_1 = arith.constant 0 : index
    %c0_2 = arith.constant 0 : index
    %2 = vector.load %arg2[%c0_1, %c0_2] : memref<128x256xbf16, #tpu.memory_space<vmem>>, vector<128x256xbf16>
    %cst = arith.constant dense<0.000000e+00> : vector<8x256xf32>
    %3 = tpu.matmul %1, %2, %cst {dimension_numbers = #tpu.dot_dimension_numbers<[1], [0], [0], [1], [0, 0, 1, 1], [], []>} : vector<8x128xbf16>, vector<128x256xbf16>, vector<8x256xf32> -> vector<8x256xf32>
    %4 = arith.truncf %3 : vector<8x256xf32> to vector<8x256xbf16>
    %c0_3 = arith.constant 0 : index
    %c0_4 = arith.constant 0 : index
    %5 = vector.load %arg3[%c0_3, %c0_4] : memref<1x256xf32, #tpu.memory_space<vmem>>, vector<1x256xf32>
    %6 = arith.truncf %5 : vector<1x256xf32> to vector<1x256xbf16>
    %7 = vector.broadcast %6 : vector<1x256xbf16> to vector<8x256xbf16>
    %8 = arith.addf %4, %7 : vector<8x256xbf16>
    %cst_5 = arith.constant 0.000000e+00 : bf16
    %9 = vector.broadcast %cst_5 : bf16 to vector<8x256xbf16>
    %10 = arith.maximumf %8, %9 : vector<8x256xbf16>
    %c0_6 = arith.constant 0 : index
    %c0_7 = arith.constant 0 : index
    %11 = vector.load %arg4[%c0_6, %c0_7] : memref<256x128xbf16, #tpu.memory_space<vmem>>, vector<256x128xbf16>
    %cst_8 = arith.constant dense<0.000000e+00> : vector<8x128xf32>
    %12 = tpu.matmul %10, %11, %cst_8 {dimension_numbers = #tpu.dot_dimension_numbers<[1], [0], [0], [1], [0, 0, 1, 1], [], []>} : vector<8x256xbf16>, vector<256x128xbf16>, vector<8x128xf32> -> vector<8x128xf32>
    %13 = arith.truncf %12 : vector<8x128xf32> to vector<8x128xbf16>
    %c0_9 = arith.constant 0 : index
    %c0_10 = arith.constant 0 : index
    %14 = vector.load %arg5[%c0_9, %c0_10] : memref<1x128xf32, #tpu.memory_space<vmem>>, vector<1x128xf32>
    %15 = arith.truncf %14 : vector<1x128xf32> to vector<1x128xbf16>
    %16 = vector.broadcast %15 : vector<1x128xbf16> to vector<8x128xbf16>
    %17 = arith.addf %13, %16 : vector<8x128xbf16>
    %cst_11 = arith.constant 0.000000e+00 : bf16
    %18 = vector.broadcast %cst_11 : bf16 to vector<8x128xbf16>
    %19 = arith.maximumf %17, %18 : vector<8x128xbf16>
    %c0_12 = arith.constant 0 : index
    %c0_13 = arith.constant 0 : index
    %20 = vector.load %arg6[%c0_12, %c0_13] : memref<128x128xbf16, #tpu.memory_space<vmem>>, vector<128x128xbf16>
    %cst_14 = arith.constant dense<0.000000e+00> : vector<8x128xf32>
    %21 = tpu.matmul %19, %20, %cst_14 {dimension_numbers = #tpu.dot_dimension_numbers<[1], [0], [0], [1], [0, 0, 1, 1], [], []>} : vector<8x128xbf16>, vector<128x128xbf16>, vector<8x128xf32> -> vector<8x128xf32>
    %c0_15 = arith.constant 0 : index
    %c0_16 = arith.constant 0 : index
    %22 = vector.load %arg7[%c0_15, %c0_16] : memref<1x128xf32, #tpu.memory_space<vmem>>, vector<1x128xf32>
    %23 = vector.broadcast %22 : vector<1x128xf32> to vector<8x128xf32>
    %24 = arith.addf %21, %23 : vector<8x128xf32>
    %c0_17 = arith.constant 0 : index
    %c0_18 = arith.constant 0 : index
    %25 = vector.load %arg8[%c0_17, %c0_18] : memref<8x128xf32, #tpu.memory_space<vmem>>, vector<8x128xf32>
    tpu.vector_store %arg8[%c0_17, %c0_18], %24 {strides = array<i32>} : memref<8x128xf32, #tpu.memory_space<vmem>>, vector<8x128xf32>,
    return
  }
  func.func @transform_0(%arg0: i32) -> (i32, i32) {
    %c0_i32 = arith.constant 0 : i32
    %c0_i32_0 = arith.constant 0 : i32
    return %arg0, %c0_i32 : i32, i32
  }
  func.func @transform_1(%arg0: i32) -> (i32, i32) {
    %c0_i32 = arith.constant 0 : i32
    %c0_i32_0 = arith.constant 0 : i32
    %c0_i32_1 = arith.constant 0 : i32
    return %c0_i32, %c0_i32_0 : i32, i32
  }
  func.func @transform_2(%arg0: i32) -> (i32, i32) {
    %c0_i32 = arith.constant 0 : i32
    %c0_i32_0 = arith.constant 0 : i32
    %c0_i32_1 = arith.constant 0 : i32
    return %c0_i32, %c0_i32_0 : i32, i32
  }
  func.func @transform_3(%arg0: i32) -> (i32, i32) {
    %c0_i32 = arith.constant 0 : i32
    %c0_i32_0 = arith.constant 0 : i32
    %c0_i32_1 = arith.constant 0 : i32
    return %c0_i32, %c0_i32_0 : i32, i32
  }
  func.func @transform_4(%arg0: i32) -> (i32, i32) {
    %c0_i32 = arith.constant 0 : i32
    %c0_i32_0 = arith.constant 0 : i32
    %c0_i32_1 = arith.constant 0 : i32
    return %c0_i32, %c0_i32_0 : i32, i32
  }
  func.func @transform_5(%arg0: i32) -> (i32, i32) {
    %c0_i32 = arith.constant 0 : i32
    %c0_i32_0 = arith.constant 0 : i32
    %c0_i32_1 = arith.constant 0 : i32
    return %c0_i32, %c0_i32_0 : i32, i32
  }
  func.func @transform_6(%arg0: i32) -> (i32, i32) {
    %c0_i32 = arith.constant 0 : i32
    %c0_i32_0 = arith.constant 0 : i32
    %c0_i32_1 = arith.constant 0 : i32
    return %c0_i32, %c0_i32_0 : i32, i32
  }
  func.func @transform_7(%arg0: i32) -> (i32, i32) {
    %c0_i32 = arith.constant 0 : i32
    %c0_i32_0 = arith.constant 0 : i32
    return %arg0, %c0_i32 : i32, i32
  }
}

</mosaic_0001>

<llo_original>
// kernel: _lambda_.1
$region0: #{_lambda_.1}
  #allocation0 [shape = 'u32[]', space=smem, size = 0x4, offset = 0x4, fixed_abs, tag = 'smem constant byte address 0x4 - core index']
  #allocation1 [shape = 'u32[144,128]{1,0:T(1,128)}', space=vmem, size = 0x12000, scoped, tag = 'internal scratch']
  %s0 = inlined_call_operand.vmem [shape: f32[8,128], index: 0, kind: input, shape index: {}]
  %s1 = inlined_call_operand.hbm [shape: bf16[128,256], index: 1, kind: input, shape index: {}]
  %s2 = inlined_call_operand.vmem [shape: f32[1,256], index: 2, kind: input, shape index: {}]
  %s3 = inlined_call_operand.hbm [shape: bf16[256,128], index: 3, kind: input, shape index: {}]
  %s4 = inlined_call_operand.vmem [shape: f32[1,128], index: 4, kind: input, shape index: {}]
  %s5 = inlined_call_operand.hbm [shape: bf16[128,128], index: 5, kind: input, shape index: {}]
  %s6 = inlined_call_operand.vmem [shape: f32[1,128], index: 6, kind: input, shape index: {}]
  %s7 = inlined_call_operand.hbm [shape: f32[8,128], index: 7, kind: output, shape index: {}]
  %s8 = sld [smem:[#allocation0]]
  $region50: #{_lambda_.1} parent=0
    _
  %s10 = ssub.s32 1, %s8
  %s11 = scalar_select 0, %s10, %s8
  $region1: #{_lambda_.1} parent=0
    #allocation2 [shape = 'u8[65536]{0}', space=vmem, size = 0x10000, scoped, tag = 'input window, operand 1, single buffered']
    #allocation3 [shape = 's32[1]{0}', space=sflag, size = 0x4, scoped, tag = 'scoped memory for _lambda_.1']
    #allocation4 [shape = 's32[1]{0}', space=sflag, size = 0x4, scoped, tag = 'scoped memory for _lambda_.1']
    #allocation5 [shape = 'u8[65536]{0}', space=vmem, size = 0x10000, scoped, tag = 'input window, operand 3, single buffered']
    #allocation6 [shape = 's32[1]{0}', space=sflag, size = 0x4, scoped, tag = 'scoped memory for _lambda_.1']
    #allocation7 [shape = 'u8[32768]{0}', space=vmem, size = 0x8000, scoped, tag = 'input window, operand 5, single buffered']
    #allocation8 [shape = 'u8[4096]{0}', space=vmem, size = 0x1000, scoped, tag = 'output window, operand 0, single buffered']
    %12 = vsyncpa [#allocation3], 0
    %13 = vsyncpa [#allocation6], 0
    %14 = vsyncpa [#allocation4], 0
    // Predicated region
    $region2: #{_lambda_.1} parent=1 // pred_check
      _
    $region3: #{_lambda_.1} parent=1 // pred_check_branch
      %16 = sbr.rel (0) target = $region5
    $region4: #{_lambda_.1} parent=1 // pred_region
      _
    $region5: #{_lambda_.1} parent=1 // pred_fallthru
      _
    // Predicated region
    $region6: #{_lambda_.1} parent=1 // pred_check
      _
    $region7: #{_lambda_.1} parent=1 // pred_check_branch
      %18 = sbr.rel (0) target = $region9
    $region8: #{_lambda_.1} parent=1 // pred_region
      %s20 = ssub.s32 2048, 2048
      %21 = vsyncadd [#allocation3], %s20
      %s22 = sshll.u32 [#allocation2], 4
      %s23 = int_to_ptr.vmem [resolvable:$true] %s22
      %28 = dma.hbm_to_vmem [thread:$0]  %s1, 2048, %s23, [#allocation3], 128, 128, 8
    $region9: #{_lambda_.1} parent=1 // pred_fallthru
      _
    // Predicated region
    $region10: #{_lambda_.1} parent=1 // pred_check
      _
    $region11: #{_lambda_.1} parent=1 // pred_check_branch
      %30 = sbr.rel (0) target = $region13
    $region12: #{_lambda_.1} parent=1 // pred_region
      _
    $region13: #{_lambda_.1} parent=1 // pred_fallthru
      _
    // Predicated region
    $region14: #{_lambda_.1} parent=1 // pred_check
      _
    $region15: #{_lambda_.1} parent=1 // pred_check_branch
      %32 = sbr.rel (0) target = $region17
    $region16: #{_lambda_.1} parent=1 // pred_region
      %s34 = ssub.s32 2048, 2048
      %35 = vsyncadd [#allocation6], %s34
      %s36 = sshll.u32 [#allocation5], 4
      %s37 = int_to_ptr.vmem [resolvable:$true] %s36
      %42 = dma.hbm_to_vmem [thread:$0]  %s3, 2048, %s37, [#allocation6], 64, 64, 4
    $region17: #{_lambda_.1} parent=1 // pred_fallthru
      _
    // Predicated region
    $region18: #{_lambda_.1} parent=1 // pred_check
      _
    $region19: #{_lambda_.1} parent=1 // pred_check_branch
      %44 = sbr.rel (0) target = $region21
    $region20: #{_lambda_.1} parent=1 // pred_region
      _
    $region21: #{_lambda_.1} parent=1 // pred_fallthru
      _
    // Predicated region
    $region22: #{_lambda_.1} parent=1 // pred_check
      _
    $region23: #{_lambda_.1} parent=1 // pred_check_branch
      %46 = sbr.rel (0) target = $region25
    $region24: #{_lambda_.1} parent=1 // pred_region
      %s48 = ssub.s32 1024, 1024
      %49 = vsyncadd [#allocation6], %s48
      %s50 = sshll.u32 [#allocation7], 4
      %s51 = int_to_ptr.vmem [resolvable:$true] %s50
      %56 = dma.hbm_to_vmem [thread:$0]  %s5, 1024, %s51, [#allocation6], 64, 64, 4
    $region25: #{_lambda_.1} parent=1 // pred_fallthru
      _
    // Predicated region
    $region26: #{_lambda_.1} parent=1 // pred_check
      _
    $region27: #{_lambda_.1} parent=1 // pred_check_branch
      %58 = sbr.rel (0) target = $region29
    $region28: #{_lambda_.1} parent=1 // pred_region
      _
    $region29: #{_lambda_.1} parent=1 // pred_fallthru
      _
    // Predicated region
    $region30: #{_lambda_.1} parent=1 // pred_check
      _
    $region31: #{_lambda_.1} parent=1 // pred_check_branch
      %60 = sbr.rel (0) target = $region33
    $region32: #{_lambda_.1} parent=1 // pred_region
      %61 = dma.done [#allocation3], 2048
    $region33: #{_lambda_.1} parent=1 // pred_fallthru
      _
    // Predicated region
    $region34: #{_lambda_.1} parent=1 // pred_check
      _
    $region35: #{_lambda_.1} parent=1 // pred_check_branch
      %63 = sbr.rel (0) target = $region37
    $region36: #{_lambda_.1} parent=1 // pred_region
      %64 = dma.done [#allocation6], 2048
    $region37: #{_lambda_.1} parent=1 // pred_fallthru
      _
    // Predicated region
    $region38: #{_lambda_.1} parent=1 // pred_check
      _
    $region39: #{_lambda_.1} parent=1 // pred_check_branch
      %66 = sbr.rel (0) target = $region41
    $region40: #{_lambda_.1} parent=1 // pred_region
      %67 = dma.done [#allocation6], 1024
    $region41: #{_lambda_.1} parent=1 // pred_fallthru
      _
    %v69 = vld [vmem:[%s0] sm:$0xff]
    %v70 = vpack.c.bf16 %v69, %v69
    %v71 = vld [vmem:[#allocation2] sm:$0xff]
    %v72 = vld [vmem:[#allocation2 + $0x8] sm:$0xff]
    %v73 = vld [vmem:[#allocation2 + $0x10] sm:$0xff]
    %v74 = vld [vmem:[#allocation2 + $0x18] sm:$0xff]
    %v75 = vld [vmem:[#allocation2 + $0x20] sm:$0xff]
    %v76 = vld [vmem:[#allocation2 + $0x28] sm:$0xff]
    %v77 = vld [vmem:[#allocation2 + $0x30] sm:$0xff]
    %v78 = vld [vmem:[#allocation2 + $0x38] sm:$0xff]
    %v79 = vld [vmem:[#allocation2 + $0x40] sm:$0xff]
    %v80 = vld [vmem:[#allocation2 + $0x48] sm:$0xff]
    %v81 = vld [vmem:[#allocation2 + $0x50] sm:$0xff]
    %v82 = vld [vmem:[#allocation2 + $0x58] sm:$0xff]
    %v83 = vld [vmem:[#allocation2 + $0x60] sm:$0xff]
    %v84 = vld [vmem:[#allocation2 + $0x68] sm:$0xff]
    %v85 = vld [vmem:[#allocation2 + $0x70] sm:$0xff]
    %v86 = vld [vmem:[#allocation2 + $0x78] sm:$0xff]
    %v103 = vunpack.c.l.b16 %v71
    %v104 = vunpack.c.h.b16 %v71
    %v105 = vunpack.c.l.b16 %v72
    %v106 = vunpack.c.h.b16 %v72
    %v107 = vunpack.c.l.b16 %v73
    %v108 = vunpack.c.h.b16 %v73
    %v109 = vunpack.c.l.b16 %v74
    %v110 = vunpack.c.h.b16 %v74
    %v111 = vunpack.c.l.b16 %v75
    %v112 = vunpack.c.h.b16 %v75
    %v113 = vunpack.c.l.b16 %v76
    %v114 = vunpack.c.h.b16 %v76
    %v115 = vunpack.c.l.b16 %v77
    %v116 = vunpack.c.h.b16 %v77
    %v117 = vunpack.c.l.b16 %v78
    %v118 = vunpack.c.h.b16 %v78
    %v119 = vunpack.c.l.b16 %v79
    %v120 = vunpack.c.h.b16 %v79
    %v121 = vunpack.c.l.b16 %v80
    %v122 = vunpack.c.h.b16 %v80
    %v123 = vunpack.c.l.b16 %v81
    %v124 = vunpack.c.h.b16 %v81
    %v125 = vunpack.c.l.b16 %v82
    %v126 = vunpack.c.h.b16 %v82
    %v127 = vunpack.c.l.b16 %v83
    %v128 = vunpack.c.h.b16 %v83
    %v129 = vunpack.c.l.b16 %v84
    %v130 = vunpack.c.h.b16 %v84
    %v131 = vunpack.c.l.b16 %v85
    %v132 = vunpack.c.h.b16 %v85
    %v133 = vunpack.c.l.b16 %v86
    %v134 = vunpack.c.h.b16 %v86
    %v135 = vpack.c.b16 %v105, %v103
    %v136 = vpack.c.b16 %v106, %v104
    %v137 = vpack.c.b16 %v109, %v107
    %v138 = vpack.c.b16 %v110, %v108
    %v139 = vpack.c.b16 %v113, %v111
    %v140 = vpack.c.b16 %v114, %v112
    %v141 = vpack.c.b16 %v117, %v115
    %v142 = vpack.c.b16 %v118, %v116
    %v143 = vpack.c.b16 %v121, %v119
    %v144 = vpack.c.b16 %v122, %v120
    %v145 = vpack.c.b16 %v125, %v123
    %v146 = vpack.c.b16 %v126, %v124
    %v147 = vpack.c.b16 %v129, %v127
    %v148 = vpack.c.b16 %v130, %v128
    %v149 = vpack.c.b16 %v133, %v131
    %v150 = vpack.c.b16 %v134, %v132
    %167 = vmatprep.subr.bf16.mxu0 %v136
    %168 = vmatpush1.bf16.msra.mxu0 %v135
    %169 = vmatprep.subr.bf16.mxu0 %v138
    %170 = vmatpush1.bf16.msra.mxu0 %v137
    %171 = vmatprep.subr.bf16.mxu0 %v140
    %172 = vmatpush1.bf16.msra.mxu0 %v139
    %173 = vmatprep.subr.bf16.mxu0 %v142
    %174 = vmatpush1.bf16.msra.mxu0 %v141
    %175 = vmatprep.subr.bf16.mxu0 %v144
    %176 = vmatpush1.bf16.msra.mxu0 %v143
    %177 = vmatprep.subr.bf16.mxu0 %v146
    %178 = vmatpush1.bf16.msra.mxu0 %v145
    %179 = vmatprep.subr.bf16.mxu0 %v148
    %180 = vmatpush1.bf16.msra.mxu0 %v147
    %181 = vmatprep.subr.bf16.mxu0 %v150
    %182 = vmatpush1.bf16.msra.mxu0 %v149
    %183 = vmatprep.subr.bf16.mxu0 0
    %184 = vmatpush1.bf16.msra.mxu0 0
    %185 = vmatprep.subr.bf16.mxu0 0
    %186 = vmatpush1.bf16.msra.mxu0 0
    %187 = vmatprep.subr.bf16.mxu0 0
    %188 = vmatpush1.bf16.msra.mxu0 0
    %189 = vmatprep.subr.bf16.mxu0 0
    %190 = vmatpush1.bf16.msra.mxu0 0
    %191 = vmatprep.subr.bf16.mxu0 0
    %192 = vmatpush1.bf16.msra.mxu0 0
    %193 = vmatprep.subr.bf16.mxu0 0
    %194 = vmatpush1.bf16.msra.mxu0 0
    %195 = vmatprep.subr.bf16.mxu0 0
    %196 = vmatpush1.bf16.msra.mxu0 0
    %197 = vmatprep.subr.bf16.mxu0 0
    %198 = vmatpush1.bf16.msra.mxu0 0
    %199 = vmatprep.mubr.bf16.mxu0 0
    %200 = vmatmul.mubr.bf16.gmra.mrb[0].mxu0 %v70
    %v201 = vpop.f32.mrb[0].mxu0
    %v202 = vadd.f32 0.0, %v201
    %v203 = vpop.f32.mrb[0].mxu0
    %v204 = vadd.f32 0.0, %v203
    %v205 = vpop.f32.mrb[0].mxu0
    %v206 = vpop.f32.mrb[0].mxu0
    %207 = vdwg.mxu0
    %v208 = vpack.c.bf16 %v202, %v202
    %v209 = vpack.c.bf16 %v204, %v204
    %v210 = vld [vmem:[%s2] sm:$0x3]
    %v212 = vlaneseq
    %v213 = vshrl.u32 %v212, 7
    %v214 = vsub.s32 0, %v213
    %v215 = vrot.slane %v210, %v214
    %v216 = vlaneseq
    %v217 = vshrl.u32 %v216, 7
    %v218 = vsub.s32 1, %v217
    %v219 = vrot.slane %v210, %v218
    %v222 = vpack.c.bf16 %v215, %v215
    %v223 = vpack.c.bf16 %v219, %v219
    %v225 = vpack.i.b16 %v222, %v222
    %v227 = vlaneseq
    %v228 = vshrl.u32 %v227, 7
    %v229 = vsub.s32 0, %v228
    %v230 = vrot.slane %v225, %v229
    %v232 = vpack.i.b16 %v223, %v223
    %v234 = vlaneseq
    %v235 = vshrl.u32 %v234, 7
    %v236 = vsub.s32 0, %v235
    %v237 = vrot.slane %v232, %v236
    %v238 = vadd.bf16 %v208, %v230
    %v239 = vadd.bf16 %v209, %v237
    %v240 = vmax.bf16 %v238, 0
    %v241 = vmax.bf16 %v239, 0
    %v242 = vld [vmem:[#allocation5] sm:$0xf]
    %v243 = vld [vmem:[#allocation5 + $0x4] sm:$0xf]
    %v244 = vld [vmem:[#allocation5 + $0x8] sm:$0xf]
    %v245 = vld [vmem:[#allocation5 + $0xc] sm:$0xf]
    %v246 = vld [vmem:[#allocation5 + $0x10] sm:$0xf]
    %v247 = vld [vmem:[#allocation5 + $0x14] sm:$0xf]
    %v248 = vld [vmem:[#allocation5 + $0x18] sm:$0xf]
    %v249 = vld [vmem:[#allocation5 + $0x1c] sm:$0xf]
    %v250 = vld [vmem:[#allocation5 + $0x20] sm:$0xf]
    %v251 = vld [vmem:[#allocation5 + $0x24] sm:$0xf]
    %v252 = vld [vmem:[#allocation5 + $0x28] sm:$0xf]
    %v253 = vld [vmem:[#allocation5 + $0x2c] sm:$0xf]
    %v254 = vld [vmem:[#allocation5 + $0x30] sm:$0xf]
    %v255 = vld [vmem:[#allocation5 + $0x34] sm:$0xf]
    %v256 = vld [vmem:[#allocation5 + $0x38] sm:$0xf]
    %v257 = vld [vmem:[#allocation5 + $0x3c] sm:$0xf]
    %v258 = vld [vmem:[#allocation5 + $0x40] sm:$0xf]
    %v259 = vld [vmem:[#allocation5 + $0x44] sm:$0xf]
    %v260 = vld [vmem:[#allocation5 + $0x48] sm:$0xf]
    %v261 = vld [vmem:[#allocation5 + $0x4c] sm:$0xf]
    %v262 = vld [vmem:[#allocation5 + $0x50] sm:$0xf]
    %v263 = vld [vmem:[#allocation5 + $0x54] sm:$0xf]
    %v264 = vld [vmem:[#allocation5 + $0x58] sm:$0xf]
    %v265 = vld [vmem:[#allocation5 + $0x5c] sm:$0xf]
    %v266 = vld [vmem:[#allocation5 + $0x60] sm:$0xf]
    %v267 = vld [vmem:[#allocation5 + $0x64] sm:$0xf]
    %v268 = vld [vmem:[#allocation5 + $0x68] sm:$0xf]
    %v269 = vld [vmem:[#allocation5 + $0x6c] sm:$0xf]
    %v270 = vld [vmem:[#allocation5 + $0x70] sm:$0xf]
    %v271 = vld [vmem:[#allocation5 + $0x74] sm:$0xf]
    %v272 = vld [vmem:[#allocation5 + $0x78] sm:$0xf]
    %v273 = vld [vmem:[#allocation5 + $0x7c] sm:$0xf]
    %v306 = vunpack.c.l.b16 %v242
    %v307 = vunpack.c.l.b16 %v243
    %v308 = vunpack.c.l.b16 %v244
    %v309 = vunpack.c.l.b16 %v245
    %v310 = vunpack.c.l.b16 %v246
    %v311 = vunpack.c.l.b16 %v247
    %v312 = vunpack.c.l.b16 %v248
    %v313 = vunpack.c.l.b16 %v249
    %v314 = vunpack.c.l.b16 %v250
    %v315 = vunpack.c.l.b16 %v251
    %v316 = vunpack.c.l.b16 %v252
    %v317 = vunpack.c.l.b16 %v253
    %v318 = vunpack.c.l.b16 %v254
    %v319 = vunpack.c.l.b16 %v255
    %v320 = vunpack.c.l.b16 %v256
    %v321 = vunpack.c.l.b16 %v257
    %v322 = vunpack.c.l.b16 %v258
    %v323 = vunpack.c.l.b16 %v259
    %v324 = vunpack.c.l.b16 %v260
    %v325 = vunpack.c.l.b16 %v261
    %v326 = vunpack.c.l.b16 %v262
    %v327 = vunpack.c.l.b16 %v263
    %v328 = vunpack.c.l.b16 %v264
    %v329 = vunpack.c.l.b16 %v265
    %v330 = vunpack.c.l.b16 %v266
    %v331 = vunpack.c.l.b16 %v267
    %v332 = vunpack.c.l.b16 %v268
    %v333 = vunpack.c.l.b16 %v269
    %v334 = vunpack.c.l.b16 %v270
    %v335 = vunpack.c.l.b16 %v271
    %v336 = vunpack.c.l.b16 %v272
    %v337 = vunpack.c.l.b16 %v273
    %v338 = vpack.c.b16 %v307, %v306
    %v339 = vpack.c.b16 %v309, %v308
    %v340 = vpack.c.b16 %v311, %v310
    %v341 = vpack.c.b16 %v313, %v312
    %v342 = vpack.c.b16 %v315, %v314
    %v343 = vpack.c.b16 %v317, %v316
    %v344 = vpack.c.b16 %v319, %v318
    %v345 = vpack.c.b16 %v321, %v320
    %v346 = vpack.c.b16 %v323, %v322
    %v347 = vpack.c.b16 %v325, %v324
    %v348 = vpack.c.b16 %v327, %v326
    %v349 = vpack.c.b16 %v329, %v328
    %v350 = vpack.c.b16 %v331, %v330
    %v351 = vpack.c.b16 %v333, %v332
    %v352 = vpack.c.b16 %v335, %v334
    %v353 = vpack.c.b16 %v337, %v336
    %370 = vmatprep.subr.bf16.mxu0 0
    %371 = vmatpush1.bf16.msra.mxu0 %v338
    %372 = vmatprep.subr.bf16.mxu0 0
    %373 = vmatpush1.bf16.msra.mxu0 %v339
    %374 = vmatprep.subr.bf16.mxu0 0
    %375 = vmatpush1.bf16.msra.mxu0 %v340
    %376 = vmatprep.subr.bf16.mxu0 0
    %377 = vmatpush1.bf16.msra.mxu0 %v341
    %378 = vmatprep.subr.bf16.mxu0 0
    %379 = vmatpush1.bf16.msra.mxu0 %v342
    %380 = vmatprep.subr.bf16.mxu0 0
    %381 = vmatpush1.bf16.msra.mxu0 %v343
    %382 = vmatprep.subr.bf16.mxu0 0
    %383 = vmatpush1.bf16.msra.mxu0 %v344
    %384 = vmatprep.subr.bf16.mxu0 0
    %385 = vmatpush1.bf16.msra.mxu0 %v345
    %386 = vmatprep.subr.bf16.mxu0 0
    %387 = vmatpush1.bf16.msra.mxu0 %v346
    %388 = vmatprep.subr.bf16.mxu0 0
    %389 = vmatpush1.bf16.msra.mxu0 %v347
    %390 = vmatprep.subr.bf16.mxu0 0
    %391 = vmatpush1.bf16.msra.mxu0 %v348
    %392 = vmatprep.subr.bf16.mxu0 0
    %393 = vmatpush1.bf16.msra.mxu0 %v349
    %394 = vmatprep.subr.bf16.mxu0 0
    %395 = vmatpush1.bf16.msra.mxu0 %v350
    %396 = vmatprep.subr.bf16.mxu0 0
    %397 = vmatpush1.bf16.msra.mxu0 %v351
    %398 = vmatprep.subr.bf16.mxu0 0
    %399 = vmatpush1.bf16.msra.mxu0 %v352
    %400 = vmatprep.subr.bf16.mxu0 0
    %401 = vmatpush1.bf16.msra.mxu0 %v353
    %402 = vmatprep.mubr.bf16.mxu0 %v241
    %403 = vmatmul.mubr.bf16.gmra.mrb[0].mxu0 %v240
    %v404 = vpop.f32.mrb[0].mxu0
    %v405 = vadd.f32 0.0, %v404
    %v406 = vpop.f32.mrb[0].mxu0
    %v407 = vpop.f32.mrb[0].mxu0
    %v408 = vpop.f32.mrb[0].mxu0
    %409 = vdwg.mxu0
    %v410 = vpack.c.bf16 %v405, %v405
    %v411 = vld [vmem:[%s4] sm:$0x1]
    %v412 = vpack.c.bf16 %v411, %v411
    %v414 = vpack.i.b16 %v412, %v412
    %v416 = vlaneseq
    %v417 = vshrl.u32 %v416, 7
    %v418 = vsub.s32 0, %v417
    %v419 = vrot.slane %v414, %v418
    %v420 = vadd.bf16 %v410, %v419
    %v421 = vmax.bf16 %v420, 0
    %v422 = vld [vmem:[#allocation7] sm:$0xf]
    %v423 = vld [vmem:[#allocation7 + $0x4] sm:$0xf]
    %v424 = vld [vmem:[#allocation7 + $0x8] sm:$0xf]
    %v425 = vld [vmem:[#allocation7 + $0xc] sm:$0xf]
    %v426 = vld [vmem:[#allocation7 + $0x10] sm:$0xf]
    %v427 = vld [vmem:[#allocation7 + $0x14] sm:$0xf]
    %v428 = vld [vmem:[#allocation7 + $0x18] sm:$0xf]
    %v429 = vld [vmem:[#allocation7 + $0x1c] sm:$0xf]
    %v430 = vld [vmem:[#allocation7 + $0x20] sm:$0xf]
    %v431 = vld [vmem:[#allocation7 + $0x24] sm:$0xf]
    %v432 = vld [vmem:[#allocation7 + $0x28] sm:$0xf]
    %v433 = vld [vmem:[#allocation7 + $0x2c] sm:$0xf]
    %v434 = vld [vmem:[#allocation7 + $0x30] sm:$0xf]
    %v435 = vld [vmem:[#allocation7 + $0x34] sm:$0xf]
    %v436 = vld [vmem:[#allocation7 + $0x38] sm:$0xf]
    %v437 = vld [vmem:[#allocation7 + $0x3c] sm:$0xf]
    %v438 = vld [vmem:[%s6] sm:$0x1]
    %v440 = vlaneseq
    %v441 = vshrl.u32 %v440, 7
    %v442 = vsub.s32 0, %v441
    %v443 = vrot.slane %v438, %v442
    %v461 = vunpack.c.l.b16 %v422
    %v462 = vunpack.c.l.b16 %v423
    %v463 = vunpack.c.l.b16 %v424
    %v464 = vunpack.c.l.b16 %v425
    %v465 = vunpack.c.l.b16 %v426
    %v466 = vunpack.c.l.b16 %v427
    %v467 = vunpack.c.l.b16 %v428
    %v468 = vunpack.c.l.b16 %v429
    %v469 = vunpack.c.l.b16 %v430
    %v470 = vunpack.c.l.b16 %v431
    %v471 = vunpack.c.l.b16 %v432
    %v472 = vunpack.c.l.b16 %v433
    %v473 = vunpack.c.l.b16 %v434
    %v474 = vunpack.c.l.b16 %v435
    %v475 = vunpack.c.l.b16 %v436
    %v476 = vunpack.c.l.b16 %v437
    %v477 = vpack.c.b16 %v462, %v461
    %v478 = vpack.c.b16 %v464, %v463
    %v479 = vpack.c.b16 %v466, %v465
    %v480 = vpack.c.b16 %v468, %v467
    %v481 = vpack.c.b16 %v470, %v469
    %v482 = vpack.c.b16 %v472, %v471
    %v483 = vpack.c.b16 %v474, %v473
    %v484 = vpack.c.b16 %v476, %v475
    %493 = vmatprep.subr.bf16.mxu0 0
    %494 = vmatpush1.bf16.msra.mxu0 %v477
    %495 = vmatprep.subr.bf16.mxu0 0
    %496 = vmatpush1.bf16.msra.mxu0 %v478
    %497 = vmatprep.subr.bf16.mxu0 0
    %498 = vmatpush1.bf16.msra.mxu0 %v479
    %499 = vmatprep.subr.bf16.mxu0 0
    %500 = vmatpush1.bf16.msra.mxu0 %v480
    %501 = vmatprep.subr.bf16.mxu0 0
    %502 = vmatpush1.bf16.msra.mxu0 %v481
    %503 = vmatprep.subr.bf16.mxu0 0
    %504 = vmatpush1.bf16.msra.mxu0 %v482
    %505 = vmatprep.subr.bf16.mxu0 0
    %506 = vmatpush1.bf16.msra.mxu0 %v483
    %507 = vmatprep.subr.bf16.mxu0 0
    %508 = vmatpush1.bf16.msra.mxu0 %v484
    %509 = vmatprep.subr.bf16.mxu0 0
    %510 = vmatpush1.bf16.msra.mxu0 0
    %511 = vmatprep.subr.bf16.mxu0 0
    %512 = vmatpush1.bf16.msra.mxu0 0
    %513 = vmatprep.subr.bf16.mxu0 0
    %514 = vmatpush1.bf16.msra.mxu0 0
    %515 = vmatprep.subr.bf16.mxu0 0
    %516 = vmatpush1.bf16.msra.mxu0 0
    %517 = vmatprep.subr.bf16.mxu0 0
    %518 = vmatpush1.bf16.msra.mxu0 0
    %519 = vmatprep.subr.bf16.mxu0 0
    %520 = vmatpush1.bf16.msra.mxu0 0
    %521 = vmatprep.subr.bf16.mxu0 0
    %522 = vmatpush1.bf16.msra.mxu0 0
    %523 = vmatprep.subr.bf16.mxu0 0
    %524 = vmatpush1.bf16.msra.mxu0 0
    %525 = vmatprep.mubr.bf16.mxu0 0
    %526 = vmatmul.mubr.bf16.gmra.mrb[0].mxu0 %v421
    %v527 = vpop.f32.mrb[0].mxu0
    %v528 = vadd.f32 %v443, %v527
    %v529 = vpop.f32.mrb[0].mxu0
    %v530 = vpop.f32.mrb[0].mxu0
    %v531 = vpop.f32.mrb[0].mxu0
    %532 = vdwg.mxu0
    %533 = vst [vmem:[#allocation8] sm:$0xff] %v528
    // Predicated region
    $region42: #{_lambda_.1} parent=1 // pred_check
      _
    $region43: #{_lambda_.1} parent=1 // pred_check_branch
      %535 = sbr.rel (0) target = $region45
    $region44: #{_lambda_.1} parent=1 // pred_region
      %s537 = ssub.s32 128, 128
      %538 = vsyncadd [#allocation4], %s537
      %s540 = sshll.u32 [#allocation8], 4
      %s541 = int_to_ptr.vmem [resolvable:$true] %s540
      %543 = dma.vmem_to_hbm [thread:$0]  %s541, 128, %s7, [#allocation4]
    $region45: #{_lambda_.1} parent=1 // pred_fallthru
      _
    // Predicated region
    $region46: #{_lambda_.1} parent=1 // pred_check
      _
    $region47: #{_lambda_.1} parent=1 // pred_check_branch
      %545 = sbr.rel (0) target = $region49
    $region48: #{_lambda_.1} parent=1 // pred_region
      %546 = dma.done [#allocation4], 128
    $region49: #{_lambda_.1} parent=1 // pred_fallthru
      _
    %547 = vsyncpa [#allocation3], 1
    %548 = vsyncpa [#allocation6], 1
    %549 = vsyncpa [#allocation4], 1

</llo_original>
